<compile_context>
chip_gen: v7x
topology: tpu7x:2x2x1
jax: 0.10.0
libtpu: 0.0.40
codegen_flags: <defaults>
</compile_context>

<pallas_src>
import functools
import math

import jax
import jax.numpy as jnp
from jax.experimental import pallas as pl
from jax.experimental.pallas import tpu as pltpu

LOG_SIG_MAX = 2.0
LOG_SIG_MIN = -20.0

_HIDDEN_PAD = 128   # hidden dim padded to a full lane width
_HEAD_W = 128       # per-head lane width (mean / log_std each occupy 128 lanes)


def _round_up(n, m):
    return ((n + m - 1) // m) * m


def _policy_kernel(x_ref, eps_ref,
                   w0_ref, b0_ref, w1_ref, b1_ref, w2_ref, b2_ref,
                   wh_ref, bh_ref,
                   out_ref, *, d_out):
    """One batch tile: 3x(Linear+ReLU) -> fused mean/log_std head ->
    tanh-Gaussian sample + log-prob, packed into a 128-lane output block."""
    x = x_ref[...]

    # --- hidden MLP: 3 x (Linear -> ReLU), all operands full (8,128) tiles ---
    h = jnp.maximum(jnp.dot(x, w0_ref[...], preferred_element_type=jnp.float32)
                    + b0_ref[...], 0.0)
    h = jnp.maximum(jnp.dot(h, w1_ref[...], preferred_element_type=jnp.float32)
                    + b1_ref[...], 0.0)
    h = jnp.maximum(jnp.dot(h, w2_ref[...], preferred_element_type=jnp.float32)
                    + b2_ref[...], 0.0)

    # --- fused heads: single matmul, mean = lanes [0,128), log_std = [128,256) ---
    head = jnp.dot(h, wh_ref[...], preferred_element_type=jnp.float32) + bh_ref[...]
    headw = head.shape[-1] // 2
    mean = head[:, :headw]                                   # (TILE_B, 128)
    log_std = jnp.clip(head[:, headw:], LOG_SIG_MIN, LOG_SIG_MAX)
    std = jnp.exp(log_std)

    # --- reparameterized sample (Normal.rsample); eps is zero in padded lanes,
    #     so padded lanes give pre_tanh = 0 -> action = 0 (clean packing). ---
    eps = eps_ref[...]                                       # (TILE_B, 128)
    pre_tanh = mean + std * eps
    action = jnp.tanh(pre_tanh)

    # --- Normal.log_prob(pre_tanh): (pre_tanh - mean)/std == eps exactly ---
    half_log_2pi = 0.5 * math.log(2.0 * math.pi)
    log_prob = (-0.5 * jnp.square(eps) - log_std - half_log_2pi
                - 2.0 * (math.log(2.0) - pre_tanh - jax.nn.softplus(-2.0 * pre_tanh)))

    # Mask out padded lanes before the reduction over the action dim.
    lane = jax.lax.broadcasted_iota(jnp.int32, log_prob.shape, 1)
    log_prob = jnp.where(lane < d_out, log_prob, 0.0)
    logp = jnp.sum(log_prob, axis=-1, keepdims=True)         # (TILE_B, 1)

    # Lane-dense packed output: action in lanes [0, d_out), logp in lane d_out.
    # action at lane d_out is exactly 0 (padded), so a masked add suffices.
    out_ref[...] = action + jnp.where(lane == d_out, logp, 0.0)


def prepare_kernel_params(params):
    """Pad/fuse the natural-shape params into the kernel's padded layout."""
    def pad_cols(a, n):
        return jnp.pad(a, ((0, 0), (0, n - a.shape[1])))

    def pad_rows(a, n):
        return jnp.pad(a, ((0, n - a.shape[0]), (0, 0)))

    hp = _HIDDEN_PAD
    w0 = pad_cols(params["w0"], hp)
    b0 = pad_cols(params["b0"], hp)
    w1 = pad_cols(pad_rows(params["w1"], hp), hp)
    b1 = pad_cols(params["b1"], hp)
    w2 = pad_cols(pad_rows(params["w2"], hp), hp)
    b2 = pad_cols(params["b2"], hp)
    # Fused head: [mean head (padded to 128 lanes) | log_std head (padded)].
    wm = pad_cols(pad_rows(params["wm"], hp), _HEAD_W)
    ws = pad_cols(pad_rows(params["ws"], hp), _HEAD_W)
    wh = jnp.concatenate([wm, ws], axis=1)                   # (hp, 256)
    bh = jnp.concatenate([pad_cols(params["bm"], _HEAD_W),
                          pad_cols(params["bs"], _HEAD_W)], axis=1)  # (1, 256)
    return dict(w0=w0, b0=b0, w1=w1, b1=b1, w2=w2, b2=b2, wh=wh, bh=bh)


def tanh_gaussian_policy_forward(x, eps, params, *, max_tile_b=1024):
    """x: (B, D_in) f32, eps: (B, D_out) f32, params: natural-shape f32 dict."""
    B, D_in = x.shape
    D_out = eps.shape[1]
    assert D_out + 1 <= _HEAD_W

    kp = prepare_kernel_params(params)

    # Batch tiling: large tiles amortize per-grid-step overhead; pad B up.
    tile_b = min(max_tile_b, _round_up(B, 8))
    b_pad = _round_up(B, tile_b)
    x_p = jnp.pad(x, ((0, b_pad - B), (0, 0)))
    eps_p = jnp.pad(eps, ((0, b_pad - B), (0, _HEAD_W - D_out)))

    grid = (b_pad // tile_b,)

    def row_spec(width):
        return pl.BlockSpec((tile_b, width), lambda i: (i, 0))

    def resident_spec(a):
        # Constant block index -> stays in VMEM across all grid steps.
        return pl.BlockSpec(a.shape, lambda i: (0, 0))

    weight_keys = ("w0", "b0", "w1", "b1", "w2", "b2", "wh", "bh")
    kernel = functools.partial(_policy_kernel, d_out=D_out)

    packed = pl.pallas_call(
        kernel,
        out_shape=jax.ShapeDtypeStruct((b_pad, _HEAD_W), jnp.float32),
        grid=grid,
        in_specs=[row_spec(D_in), row_spec(_HEAD_W)]
                 + [resident_spec(kp[k]) for k in weight_keys],
        out_specs=row_spec(_HEAD_W),
        compiler_params=pltpu.CompilerParams(
            dimension_semantics=("parallel",),
            vmem_limit_bytes=32 * 1024 * 1024,
        ),
    )(x_p, eps_p, *(kp[k] for k in weight_keys))

    action = packed[:B, :D_out]
    log_prob = packed[:B, D_out:D_out + 1]
    return action, log_prob


def init_params(key, input_dim, output_dim, hidden_dim, init_w=0.001):
    """Deterministic synthetic init mirroring the PyTorch module's shapes."""
    ks = jax.random.split(key, 10)

    def linear(kw, kb, fan_in, fan_out, bound=None):
        if bound is None:
            bound = 1.0 / math.sqrt(fan_in)  # PyTorch default Linear init range
        w = jax.random.uniform(kw, (fan_in, fan_out), jnp.float32, -bound, bound)
        b = jax.random.uniform(kb, (1, fan_out), jnp.float32, -bound, bound)
        return w, b

    w0, b0 = linear(ks[0], ks[1], input_dim, hidden_dim)
    w1, b1 = linear(ks[2], ks[3], hidden_dim, hidden_dim)
    w2, b2 = linear(ks[4], ks[5], hidden_dim, hidden_dim)
    wm, bm = linear(ks[6], ks[7], hidden_dim, output_dim, bound=init_w)
    ws, bs = linear(ks[8], ks[9], hidden_dim, output_dim, bound=init_w)
    return dict(w0=w0, b0=b0, w1=w1, b1=b1, w2=w2, b2=b2,
                wm=wm, bm=bm, ws=ws, bs=bs)


def reference_forward(x, eps, params):
    """Pure-JAX reference of the PyTorch forward (stochastic branch)."""
    h = x
    for wk, bk in (("w0", "b0"), ("w1", "b1"), ("w2", "b2")):
        h = jax.nn.relu(h @ params[wk] + params[bk])
    mean = h @ params["wm"] + params["bm"]
    log_std = jnp.clip(h @ params["ws"] + params["bs"], LOG_SIG_MIN, LOG_SIG_MAX)
    std = jnp.exp(log_std)
    pre = mean + std * eps
    lp = -0.5 * ((pre - mean) / std) ** 2 - log_std - 0.5 * math.log(2 * math.pi)
    lp = lp - 2.0 * (math.log(2.0) - pre - jax.nn.softplus(-2.0 * pre))
    return jnp.tanh(pre), jnp.sum(lp, axis=-1, keepdims=True)


if __name__ == "__main__":
    # Small shapes consistent with the module: obs_dim=16, act_dim=8, hidden=32.
    batch, input_dim, output_dim, hidden_dim = 8, 16, 8, 32

    key = jax.random.PRNGKey(0)
    k_params, k_x, k_eps = jax.random.split(key, 3)

    params = init_params(k_params, input_dim, output_dim, hidden_dim)
    x = jax.random.normal(k_x, (batch, input_dim), jnp.float32)
    eps = jax.random.normal(k_eps, (batch, output_dim), jnp.float32)

    action, log_prob = tanh_gaussian_policy_forward(x, eps, params)
    jax.block_until_ready((action, log_prob))

    ref_action, ref_logp = reference_forward(x, eps, params)
    assert action.shape == (batch, output_dim)
    assert log_prob.shape == (batch, 1)
    assert jnp.allclose(action, ref_action, atol=1e-5, rtol=1e-5)
    assert jnp.allclose(log_prob, ref_logp, atol=1e-4, rtol=1e-4)

    print("KERNEL_OK")
</pallas_src>

<mosaic_0001>
module attributes {stable_mosaic.version = 11 : i64} {
  func.func @_policy_kernel(%arg0: i32, %arg1: memref<8x16xf32, #tpu.memory_space<vmem>>, %arg2: memref<8x128xf32, #tpu.memory_space<vmem>>, %arg3: memref<16x128xf32, #tpu.memory_space<vmem>>, %arg4: memref<1x128xf32, #tpu.memory_space<vmem>>, %arg5: memref<128x128xf32, #tpu.memory_space<vmem>>, %arg6: memref<1x128xf32, #tpu.memory_space<vmem>>, %arg7: memref<128x128xf32, #tpu.memory_space<vmem>>, %arg8: memref<1x128xf32, #tpu.memory_space<vmem>>, %arg9: memref<128x256xf32, #tpu.memory_space<vmem>>, %arg10: memref<1x256xf32, #tpu.memory_space<vmem>>, %arg11: memref<8x128xf32, #tpu.memory_space<vmem>>) attributes {dimension_semantics = [#tpu.dimension_semantics<parallel>], iteration_bounds = array<i64: 1>, scalar_prefetch = 0 : i64, scratch_operands = 0 : i64, tpu.core_type = #tpu.core_type<tc>, window_params = [{transform_indices = @transform_0, window_bounds = array<i64: 8, 16>}, {transform_indices = @transform_1, window_bounds = array<i64: 8, 128>}, {pipeline_mode = #tpu.pipeline_mode<synchronous>, transform_indices = @transform_2, window_bounds = array<i64: 16, 128>}, {pipeline_mode = #tpu.pipeline_mode<synchronous>, transform_indices = @transform_3, window_bounds = array<i64: 1, 128>}, {pipeline_mode = #tpu.pipeline_mode<synchronous>, transform_indices = @transform_4, window_bounds = array<i64: 128, 128>}, {pipeline_mode = #tpu.pipeline_mode<synchronous>, transform_indices = @transform_5, window_bounds = array<i64: 1, 128>}, {pipeline_mode = #tpu.pipeline_mode<synchronous>, transform_indices = @transform_6, window_bounds = array<i64: 128, 128>}, {pipeline_mode = #tpu.pipeline_mode<synchronous>, transform_indices = @transform_7, window_bounds = array<i64: 1, 128>}, {pipeline_mode = #tpu.pipeline_mode<synchronous>, transform_indices = @transform_8, window_bounds = array<i64: 128, 256>}, {pipeline_mode = #tpu.pipeline_mode<synchronous>, transform_indices = @transform_9, window_bounds = array<i64: 1, 256>}, {transform_indices = @transform_10, window_bounds = array<i64: 8, 128>}]} {
    %c0 = arith.constant 0 : index
    %c0_0 = arith.constant 0 : index
    %0 = vector.load %arg1[%c0, %c0_0] : memref<8x16xf32, #tpu.memory_space<vmem>>, vector<8x16xf32>
    %c0_1 = arith.constant 0 : index
    %c0_2 = arith.constant 0 : index
    %1 = vector.load %arg3[%c0_1, %c0_2] : memref<16x128xf32, #tpu.memory_space<vmem>>, vector<16x128xf32>
    %cst = arith.constant dense<0.000000e+00> : vector<8x128xf32>
    %2 = tpu.matmul %0, %1, %cst {dimension_numbers = #tpu.dot_dimension_numbers<[1], [0], [0], [1], [0, 0, 1, 1], [], []>} : vector<8x16xf32>, vector<16x128xf32>, vector<8x128xf32> -> vector<8x128xf32>
    %c0_3 = arith.constant 0 : index
    %c0_4 = arith.constant 0 : index
    %3 = vector.load %arg4[%c0_3, %c0_4] : memref<1x128xf32, #tpu.memory_space<vmem>>, vector<1x128xf32>
    %4 = vector.broadcast %3 : vector<1x128xf32> to vector<8x128xf32>
    %5 = arith.addf %2, %4 : vector<8x128xf32>
    %cst_5 = arith.constant 0.000000e+00 : f32
    %6 = vector.broadcast %cst_5 : f32 to vector<8x128xf32>
    %7 = arith.maximumf %5, %6 : vector<8x128xf32>
    %c0_6 = arith.constant 0 : index
    %c0_7 = arith.constant 0 : index
    %8 = vector.load %arg5[%c0_6, %c0_7] : memref<128x128xf32, #tpu.memory_space<vmem>>, vector<128x128xf32>
    %cst_8 = arith.constant dense<0.000000e+00> : vector<8x128xf32>
    %9 = tpu.matmul %7, %8, %cst_8 {dimension_numbers = #tpu.dot_dimension_numbers<[1], [0], [0], [1], [0, 0, 1, 1], [], []>} : vector<8x128xf32>, vector<128x128xf32>, vector<8x128xf32> -> vector<8x128xf32>
    %c0_9 = arith.constant 0 : index
    %c0_10 = arith.constant 0 : index
    %10 = vector.load %arg6[%c0_9, %c0_10] : memref<1x128xf32, #tpu.memory_space<vmem>>, vector<1x128xf32>
    %11 = vector.broadcast %10 : vector<1x128xf32> to vector<8x128xf32>
    %12 = arith.addf %9, %11 : vector<8x128xf32>
    %cst_11 = arith.constant 0.000000e+00 : f32
    %13 = vector.broadcast %cst_11 : f32 to vector<8x128xf32>
    %14 = arith.maximumf %12, %13 : vector<8x128xf32>
    %c0_12 = arith.constant 0 : index
    %c0_13 = arith.constant 0 : index
    %15 = vector.load %arg7[%c0_12, %c0_13] : memref<128x128xf32, #tpu.memory_space<vmem>>, vector<128x128xf32>
    %cst_14 = arith.constant dense<0.000000e+00> : vector<8x128xf32>
    %16 = tpu.matmul %14, %15, %cst_14 {dimension_numbers = #tpu.dot_dimension_numbers<[1], [0], [0], [1], [0, 0, 1, 1], [], []>} : vector<8x128xf32>, vector<128x128xf32>, vector<8x128xf32> -> vector<8x128xf32>
    %c0_15 = arith.constant 0 : index
    %c0_16 = arith.constant 0 : index
    %17 = vector.load %arg8[%c0_15, %c0_16] : memref<1x128xf32, #tpu.memory_space<vmem>>, vector<1x128xf32>
    %18 = vector.broadcast %17 : vector<1x128xf32> to vector<8x128xf32>
    %19 = arith.addf %16, %18 : vector<8x128xf32>
    %cst_17 = arith.constant 0.000000e+00 : f32
    %20 = vector.broadcast %cst_17 : f32 to vector<8x128xf32>
    %21 = arith.maximumf %19, %20 : vector<8x128xf32>
    %c0_18 = arith.constant 0 : index
    %c0_19 = arith.constant 0 : index
    %22 = vector.load %arg9[%c0_18, %c0_19] : memref<128x256xf32, #tpu.memory_space<vmem>>, vector<128x256xf32>
    %cst_20 = arith.constant dense<0.000000e+00> : vector<8x256xf32>
    %23 = tpu.matmul %21, %22, %cst_20 {dimension_numbers = #tpu.dot_dimension_numbers<[1], [0], [0], [1], [0, 0, 1, 1], [], []>} : vector<8x128xf32>, vector<128x256xf32>, vector<8x256xf32> -> vector<8x256xf32>
    %c0_21 = arith.constant 0 : index
    %c0_22 = arith.constant 0 : index
    %24 = vector.load %arg10[%c0_21, %c0_22] : memref<1x256xf32, #tpu.memory_space<vmem>>, vector<1x256xf32>
    %25 = vector.broadcast %24 : vector<1x256xf32> to vector<8x256xf32>
    %26 = arith.addf %23, %25 : vector<8x256xf32>
    %27 = vector.extract_strided_slice %26 {offsets = [0, 0], sizes = [8, 128], strides = [1, 1]} : vector<8x256xf32> to vector<8x128xf32>
    %28 = vector.extract_strided_slice %26 {offsets = [0, 128], sizes = [8, 128], strides = [1, 1]} : vector<8x256xf32> to vector<8x128xf32>
    %cst_23 = arith.constant -2.000000e+01 : f32
    %cst_24 = arith.constant 2.000000e+00 : f32
    %29 = vector.broadcast %cst_23 : f32 to vector<8x128xf32>
    %30 = arith.maximumf %29, %28 : vector<8x128xf32>
    %31 = vector.broadcast %cst_24 : f32 to vector<8x128xf32>
    %32 = arith.minimumf %31, %30 : vector<8x128xf32>
    %33 = math.exp %32 : vector<8x128xf32>
    %c0_25 = arith.constant 0 : index
    %c0_26 = arith.constant 0 : index
    %34 = vector.load %arg2[%c0_25, %c0_26] : memref<8x128xf32, #tpu.memory_space<vmem>>, vector<8x128xf32>
    %35 = arith.mulf %33, %34 : vector<8x128xf32>
    %36 = arith.addf %27, %35 : vector<8x128xf32>
    %37 = math.tanh %36 : vector<8x128xf32>
    %38 = arith.mulf %34, %34 : vector<8x128xf32>
    %cst_27 = arith.constant -5.000000e-01 : f32
    %39 = vector.broadcast %cst_27 : f32 to vector<8x128xf32>
    %40 = arith.mulf %39, %38 : vector<8x128xf32>
    %41 = arith.subf %40, %32 : vector<8x128xf32>
    %cst_28 = arith.constant 0.918938517 : f32
    %42 = vector.broadcast %cst_28 : f32 to vector<8x128xf32>
    %43 = arith.subf %41, %42 : vector<8x128xf32>
    %cst_29 = arith.constant 0.693147182 : f32
    %44 = vector.broadcast %cst_29 : f32 to vector<8x128xf32>
    %45 = arith.subf %44, %36 : vector<8x128xf32>
    %cst_30 = arith.constant -2.000000e+00 : f32
    %46 = vector.broadcast %cst_30 : f32 to vector<8x128xf32>
    %47 = arith.mulf %46, %36 : vector<8x128xf32>
    %cst_31 = arith.constant 0.000000e+00 : f32
    %48 = vector.broadcast %cst_31 : f32 to vector<8x128xf32>
    %49 = arith.maximumf %47, %48 : vector<8x128xf32>
    %50 = vector.broadcast %cst_31 : f32 to vector<8x128xf32>
    %51 = arith.subf %47, %50 : vector<8x128xf32>
    %52 = arith.cmpf one, %51, %51 : vector<8x128xf32>
    %53 = vector.broadcast %cst_31 : f32 to vector<8x128xf32>
    %54 = arith.addf %47, %53 : vector<8x128xf32>
    %55 = math.absf %51 : vector<8x128xf32>
    %cst_32 = arith.constant 0.000000e+00 : f32
    %56 = vector.broadcast %cst_32 : f32 to vector<8x128xf32>
    %57 = arith.subf %56, %55 : vector<8x128xf32>
    %58 = math.exp %57 : vector<8x128xf32>
    %59 = math.log1p %58 : vector<8x128xf32>
    %60 = arith.addf %49, %59 : vector<8x128xf32>
    %61 = arith.select %52, %54, %60 : vector<8x128xi1>, vector<8x128xf32>
    %62 = arith.subf %45, %61 : vector<8x128xf32>
    %cst_33 = arith.constant 2.000000e+00 : f32
    %63 = vector.broadcast %cst_33 : f32 to vector<8x128xf32>
    %64 = arith.mulf %63, %62 : vector<8x128xf32>
    %65 = arith.subf %43, %64 : vector<8x128xf32>
    %66 = tpu.iota {dimensions = array<i32: 1>} : vector<8x128xi32>
    %c8_i32 = arith.constant 8 : i32
    %67 = vector.broadcast %c8_i32 : i32 to vector<8x128xi32>
    %68 = arith.cmpi slt, %66, %67 : vector<8x128xi32>
    %cst_34 = arith.constant 0.000000e+00 : f32
    %69 = vector.broadcast %cst_34 : f32 to vector<8x128xf32>
    %70 = arith.select %68, %65, %69 : vector<8x128xi1>, vector<8x128xf32>
    %cst_35 = arith.constant dense<0.000000e+00> : vector<8xf32>
    %71 = vector.multi_reduction <add>, %70, %cst_35 [1] : vector<8x128xf32> to vector<8xf32>
    %72 = vector.shape_cast %71 : vector<8xf32> to vector<8x1xf32>
    %c8_i32_36 = arith.constant 8 : i32
    %73 = vector.broadcast %c8_i32_36 : i32 to vector<8x128xi32>
    %74 = arith.cmpi eq, %66, %73 : vector<8x128xi32>
    %cst_37 = arith.constant 0.000000e+00 : f32
    %75 = vector.shape_cast %72 : vector<8x1xf32> to vector<8x1xf32>
    %76 = vector.broadcast %75 : vector<8x1xf32> to vector<8x128xf32>
    %77 = vector.broadcast %cst_37 : f32 to vector<8x128xf32>
    %78 = arith.select %74, %76, %77 : vector<8x128xi1>, vector<8x128xf32>
    %79 = arith.addf %37, %78 : vector<8x128xf32>
    %c0_38 = arith.constant 0 : index
    %c0_39 = arith.constant 0 : index
    %80 = vector.load %arg11[%c0_38, %c0_39] : memref<8x128xf32, #tpu.memory_space<vmem>>, vector<8x128xf32>
    tpu.vector_store %arg11[%c0_38, %c0_39], %79 {strides = array<i32>} : memref<8x128xf32, #tpu.memory_space<vmem>>, vector<8x128xf32>,
    return
  }
  func.func @transform_0(%arg0: i32) -> (i32, i32) {
    %c0_i32 = arith.constant 0 : i32
    %c0_i32_0 = arith.constant 0 : i32
    return %arg0, %c0_i32 : i32, i32
  }
  func.func @transform_1(%arg0: i32) -> (i32, i32) {
    %c0_i32 = arith.constant 0 : i32
    %c0_i32_0 = arith.constant 0 : i32
    return %arg0, %c0_i32 : i32, i32
  }
  func.func @transform_2(%arg0: i32) -> (i32, i32) {
    %c0_i32 = arith.constant 0 : i32
    %c0_i32_0 = arith.constant 0 : i32
    %c0_i32_1 = arith.constant 0 : i32
    return %c0_i32, %c0_i32_0 : i32, i32
  }
  func.func @transform_3(%arg0: i32) -> (i32, i32) {
    %c0_i32 = arith.constant 0 : i32
    %c0_i32_0 = arith.constant 0 : i32
    %c0_i32_1 = arith.constant 0 : i32
    return %c0_i32, %c0_i32_0 : i32, i32
  }
  func.func @transform_4(%arg0: i32) -> (i32, i32) {
    %c0_i32 = arith.constant 0 : i32
    %c0_i32_0 = arith.constant 0 : i32
    %c0_i32_1 = arith.constant 0 : i32
    return %c0_i32, %c0_i32_0 : i32, i32
  }
  func.func @transform_5(%arg0: i32) -> (i32, i32) {
    %c0_i32 = arith.constant 0 : i32
    %c0_i32_0 = arith.constant 0 : i32
    %c0_i32_1 = arith.constant 0 : i32
    return %c0_i32, %c0_i32_0 : i32, i32
  }
  func.func @transform_6(%arg0: i32) -> (i32, i32) {
    %c0_i32 = arith.constant 0 : i32
    %c0_i32_0 = arith.constant 0 : i32
    %c0_i32_1 = arith.constant 0 : i32
    return %c0_i32, %c0_i32_0 : i32, i32
  }
  func.func @transform_7(%arg0: i32) -> (i32, i32) {
    %c0_i32 = arith.constant 0 : i32
    %c0_i32_0 = arith.constant 0 : i32
    %c0_i32_1 = arith.constant 0 : i32
    return %c0_i32, %c0_i32_0 : i32, i32
  }
  func.func @transform_8(%arg0: i32) -> (i32, i32) {
    %c0_i32 = arith.constant 0 : i32
    %c0_i32_0 = arith.constant 0 : i32
    %c0_i32_1 = arith.constant 0 : i32
    return %c0_i32, %c0_i32_0 : i32, i32
  }
  func.func @transform_9(%arg0: i32) -> (i32, i32) {
    %c0_i32 = arith.constant 0 : i32
    %c0_i32_0 = arith.constant 0 : i32
    %c0_i32_1 = arith.constant 0 : i32
    return %c0_i32, %c0_i32_0 : i32, i32
  }
  func.func @transform_10(%arg0: i32) -> (i32, i32) {
    %c0_i32 = arith.constant 0 : i32
    %c0_i32_0 = arith.constant 0 : i32
    return %arg0, %c0_i32 : i32, i32
  }
}

</mosaic_0001>

<llo_original>
// kernel: tpu_custom_call.1
$region0: #{tpu_custom_call.1}
  #allocation0 [shape = 'u32[]', space=smem, size = 0x4, offset = 0x4, fixed_abs, tag = 'smem constant byte address 0x4 - core index']
  #allocation1 [shape = 'u32[144,128]{1,0:T(1,128)}', space=vmem, size = 0x12000, scoped, tag = 'internal scratch']
  %s0 = inlined_call_operand.hbm [shape: f32[8,16], index: 0, kind: input, shape index: {}]
  %s1 = inlined_call_operand.hbm [shape: f32[8,128], index: 1, kind: input, shape index: {}]
  %s2 = inlined_call_operand.hbm [shape: f32[16,128], index: 2, kind: input, shape index: {}]
  %s3 = inlined_call_operand.vmem [shape: f32[1,128], index: 3, kind: input, shape index: {}]
  %s4 = inlined_call_operand.hbm [shape: f32[128,128], index: 4, kind: input, shape index: {}]
  %s5 = inlined_call_operand.vmem [shape: f32[1,128], index: 5, kind: input, shape index: {}]
  %s6 = inlined_call_operand.hbm [shape: f32[128,128], index: 6, kind: input, shape index: {}]
  %s7 = inlined_call_operand.vmem [shape: f32[1,128], index: 7, kind: input, shape index: {}]
  %s8 = inlined_call_operand.hbm [shape: f32[128,256], index: 8, kind: input, shape index: {}]
  %s9 = inlined_call_operand.vmem [shape: f32[1,256], index: 9, kind: input, shape index: {}]
  %s10 = inlined_call_operand.hbm [shape: f32[8,128], index: 10, kind: output, shape index: {}]
  %s11 = sld [smem:[#allocation0]]
  $region74: #{tpu_custom_call.1} parent=0
    _
  %s13 = ssub.s32 1, %s11
  %s14 = scalar_select 0, %s13, %s11
  $region1: #{tpu_custom_call.1} parent=0
    #allocation2 [shape = 'u8[4096]{0}', space=vmem, size = 0x1000, scoped, tag = 'input window, operand 0, single buffered']
    #allocation3 [shape = 's32[1]{0}', space=sflag, size = 0x4, scoped, tag = 'scoped memory for tpu_custom_call.1']
    #allocation4 [shape = 's32[1]{0}', space=sflag, size = 0x4, scoped, tag = 'scoped memory for tpu_custom_call.1']
    #allocation5 [shape = 'u8[4096]{0}', space=vmem, size = 0x1000, scoped, tag = 'input window, operand 1, single buffered']
    #allocation6 [shape = 's32[1]{0}', space=sflag, size = 0x4, scoped, tag = 'scoped memory for tpu_custom_call.1']
    #allocation7 [shape = 'u8[8192]{0}', space=vmem, size = 0x2000, scoped, tag = 'input window, operand 2, single buffered']
    #allocation8 [shape = 'u8[65536]{0}', space=vmem, size = 0x10000, scoped, tag = 'input window, operand 4, single buffered']
    #allocation9 [shape = 's32[1]{0}', space=sflag, size = 0x4, scoped, tag = 'scoped memory for tpu_custom_call.1']
    #allocation10 [shape = 'u8[65536]{0}', space=vmem, size = 0x10000, scoped, tag = 'input window, operand 6, single buffered']
    #allocation11 [shape = 'u8[131072]{0}', space=vmem, size = 0x20000, scoped, tag = 'input window, operand 8, single buffered']
    #allocation12 [shape = 's32[1]{0}', space=sflag, size = 0x4, scoped, tag = 'scoped memory for tpu_custom_call.1']
    #allocation13 [shape = 'u8[4096]{0}', space=vmem, size = 0x1000, scoped, tag = 'output window, operand 0, single buffered']
    %15 = vsyncpa [#allocation3], 0
    %16 = vsyncpa [#allocation6], 0
    %17 = vsyncpa [#allocation9], 0
    %18 = vsyncpa [#allocation12], 0
    %19 = vsyncpa [#allocation4], 0
    // Predicated region
    $region2: #{tpu_custom_call.1} parent=1 // pred_check
      _
    $region3: #{tpu_custom_call.1} parent=1 // pred_check_branch
      %21 = sbr.rel (0) target = $region5
    $region4: #{tpu_custom_call.1} parent=1 // pred_region
      %s23 = ssub.s32 128, 128
      %24 = vsyncadd [#allocation3], %s23
      %s26 = sshll.u32 [#allocation2], 4
      %s27 = int_to_ptr.vmem [resolvable:$true] %s26
      %29 = dma.hbm_to_vmem [thread:$0]  %s0, 128, %s27, [#allocation3]
    $region5: #{tpu_custom_call.1} parent=1 // pred_fallthru
      _
    // Predicated region
    $region6: #{tpu_custom_call.1} parent=1 // pred_check
      _
    $region7: #{tpu_custom_call.1} parent=1 // pred_check_branch
      %31 = sbr.rel (0) target = $region9
    $region8: #{tpu_custom_call.1} parent=1 // pred_region
      %s33 = ssub.s32 128, 128
      %34 = vsyncadd [#allocation6], %s33
      %s36 = sshll.u32 [#allocation5], 4
      %s37 = int_to_ptr.vmem [resolvable:$true] %s36
      %39 = dma.hbm_to_vmem [thread:$0]  %s1, 128, %s37, [#allocation6]
    $region9: #{tpu_custom_call.1} parent=1 // pred_fallthru
      _
    // Predicated region
    $region10: #{tpu_custom_call.1} parent=1 // pred_check
      _
    $region11: #{tpu_custom_call.1} parent=1 // pred_check_branch
      %41 = sbr.rel (0) target = $region13
    $region12: #{tpu_custom_call.1} parent=1 // pred_region
      %s43 = ssub.s32 256, 256
      %44 = vsyncadd [#allocation6], %s43
      %s45 = sshll.u32 [#allocation7], 4
      %s46 = int_to_ptr.vmem [resolvable:$true] %s45
      %51 = dma.hbm_to_vmem [thread:$0]  %s2, 256, %s46, [#allocation6], 128, 128, 8
    $region13: #{tpu_custom_call.1} parent=1 // pred_fallthru
      _
    // Predicated region
    $region14: #{tpu_custom_call.1} parent=1 // pred_check
      _
    $region15: #{tpu_custom_call.1} parent=1 // pred_check_branch
      %53 = sbr.rel (0) target = $region17
    $region16: #{tpu_custom_call.1} parent=1 // pred_region
      _
    $region17: #{tpu_custom_call.1} parent=1 // pred_fallthru
      _
    // Predicated region
    $region18: #{tpu_custom_call.1} parent=1 // pred_check
      _
    $region19: #{tpu_custom_call.1} parent=1 // pred_check_branch
      %55 = sbr.rel (0) target = $region21
    $region20: #{tpu_custom_call.1} parent=1 // pred_region
      %s57 = ssub.s32 2048, 2048
      %58 = vsyncadd [#allocation9], %s57
      %s59 = sshll.u32 [#allocation8], 4
      %s60 = int_to_ptr.vmem [resolvable:$true] %s59
      %65 = dma.hbm_to_vmem [thread:$0]  %s4, 2048, %s60, [#allocation9], 128, 128, 8
    $region21: #{tpu_custom_call.1} parent=1 // pred_fallthru
      _
    // Predicated region
    $region22: #{tpu_custom_call.1} parent=1 // pred_check
      _
    $region23: #{tpu_custom_call.1} parent=1 // pred_check_branch
      %67 = sbr.rel (0) target = $region25
    $region24: #{tpu_custom_call.1} parent=1 // pred_region
      _
    $region25: #{tpu_custom_call.1} parent=1 // pred_fallthru
      _
    // Predicated region
    $region26: #{tpu_custom_call.1} parent=1 // pred_check
      _
    $region27: #{tpu_custom_call.1} parent=1 // pred_check_branch
      %69 = sbr.rel (0) target = $region29
    $region28: #{tpu_custom_call.1} parent=1 // pred_region
      %s71 = ssub.s32 2048, 2048
      %72 = vsyncadd [#allocation9], %s71
      %s73 = sshll.u32 [#allocation10], 4
      %s74 = int_to_ptr.vmem [resolvable:$true] %s73
      %79 = dma.hbm_to_vmem [thread:$0]  %s6, 2048, %s74, [#allocation9], 128, 128, 8
    $region29: #{tpu_custom_call.1} parent=1 // pred_fallthru
      _
    // Predicated region
    $region30: #{tpu_custom_call.1} parent=1 // pred_check
      _
    $region31: #{tpu_custom_call.1} parent=1 // pred_check_branch
      %81 = sbr.rel (0) target = $region33
    $region32: #{tpu_custom_call.1} parent=1 // pred_region
      _
    $region33: #{tpu_custom_call.1} parent=1 // pred_fallthru
      _
    // Predicated region
    $region34: #{tpu_custom_call.1} parent=1 // pred_check
      _
    $region35: #{tpu_custom_call.1} parent=1 // pred_check_branch
      %83 = sbr.rel (0) target = $region37
    $region36: #{tpu_custom_call.1} parent=1 // pred_region
      %s85 = ssub.s32 4096, 4096
      %86 = vsyncadd [#allocation12], %s85
      %s87 = sshll.u32 [#allocation11], 4
      %s88 = int_to_ptr.vmem [resolvable:$true] %s87
      %93 = dma.hbm_to_vmem [thread:$0]  %s8, 4096, %s88, [#allocation12], 256, 256, 16
    $region37: #{tpu_custom_call.1} parent=1 // pred_fallthru
      _
    // Predicated region
    $region38: #{tpu_custom_call.1} parent=1 // pred_check
      _
    $region39: #{tpu_custom_call.1} parent=1 // pred_check_branch
      %95 = sbr.rel (0) target = $region41
    $region40: #{tpu_custom_call.1} parent=1 // pred_region
      _
    $region41: #{tpu_custom_call.1} parent=1 // pred_fallthru
      _
    // Predicated region
    $region42: #{tpu_custom_call.1} parent=1 // pred_check
      _
    $region43: #{tpu_custom_call.1} parent=1 // pred_check_branch
      %97 = sbr.rel (0) target = $region45
    $region44: #{tpu_custom_call.1} parent=1 // pred_region
      %98 = dma.done [#allocation3], 128
    $region45: #{tpu_custom_call.1} parent=1 // pred_fallthru
      _
    // Predicated region
    $region46: #{tpu_custom_call.1} parent=1 // pred_check
      _
    $region47: #{tpu_custom_call.1} parent=1 // pred_check_branch
      %100 = sbr.rel (0) target = $region49
    $region48: #{tpu_custom_call.1} parent=1 // pred_region
      %101 = dma.done [#allocation6], 128
    $region49: #{tpu_custom_call.1} parent=1 // pred_fallthru
      _
    // Predicated region
    $region50: #{tpu_custom_call.1} parent=1 // pred_check
      _
    $region51: #{tpu_custom_call.1} parent=1 // pred_check_branch
      %103 = sbr.rel (0) target = $region53
    $region52: #{tpu_custom_call.1} parent=1 // pred_region
      %104 = dma.done [#allocation6], 256
    $region53: #{tpu_custom_call.1} parent=1 // pred_fallthru
      _
    // Predicated region
    $region54: #{tpu_custom_call.1} parent=1 // pred_check
      _
    $region55: #{tpu_custom_call.1} parent=1 // pred_check_branch
      %106 = sbr.rel (0) target = $region57
    $region56: #{tpu_custom_call.1} parent=1 // pred_region
      %107 = dma.done [#allocation9], 2048
    $region57: #{tpu_custom_call.1} parent=1 // pred_fallthru
      _
    // Predicated region
    $region58: #{tpu_custom_call.1} parent=1 // pred_check
      _
    $region59: #{tpu_custom_call.1} parent=1 // pred_check_branch
      %109 = sbr.rel (0) target = $region61
    $region60: #{tpu_custom_call.1} parent=1 // pred_region
      %110 = dma.done [#allocation9], 2048
    $region61: #{tpu_custom_call.1} parent=1 // pred_fallthru
      _
    // Predicated region
    $region62: #{tpu_custom_call.1} parent=1 // pred_check
      _
    $region63: #{tpu_custom_call.1} parent=1 // pred_check_branch
      %112 = sbr.rel (0) target = $region65
    $region64: #{tpu_custom_call.1} parent=1 // pred_region
      %113 = dma.done [#allocation12], 4096
    $region65: #{tpu_custom_call.1} parent=1 // pred_fallthru
      _
    %v114 = vld [vmem:[#allocation2] sm:$0xff]
    %v115 = vld [vmem:[#allocation7] sm:$0xff]
    %v116 = vld [vmem:[#allocation7 + $0x8] sm:$0xff]
    %v117 = vld [vmem:[%s3] sm:$0x1]
    %v119 = vlaneseq
    %v120 = vshrl.u32 %v119, 7
    %v121 = vsub.s32 0, %v120
    %v122 = vrot.slane %v117, %v121
    %vm124 = vcmask 130048
    %v126 = vsel %vm124, %v114, 0
    %128 = vmatprep.subr.mxu0 0.0
    %129 = vmatpush1.msra.mxu0 %v115
    %130 = vmatprep.subr.mxu0 0.0
    %131 = vmatpush1.msra.mxu0 %v116
    %132 = vmatprep.subr.mxu0 0.0
    %133 = vmatpush1.msra.mxu0 0.0
    %134 = vmatprep.subr.mxu0 0.0
    %135 = vmatpush1.msra.mxu0 0.0
    %136 = vmatprep.subr.mxu0 0.0
    %137 = vmatpush1.msra.mxu0 0.0
    %138 = vmatprep.subr.mxu0 0.0
    %139 = vmatpush1.msra.mxu0 0.0
    %140 = vmatprep.subr.mxu0 0.0
    %141 = vmatpush1.msra.mxu0 0.0
    %142 = vmatprep.subr.mxu0 0.0
    %143 = vmatpush1.msra.mxu0 0.0
    %144 = vmatprep.subr.mxu0 0.0
    %145 = vmatpush1.msra.mxu0 0.0
    %146 = vmatprep.subr.mxu0 0.0
    %147 = vmatpush1.msra.mxu0 0.0
    %148 = vmatprep.subr.mxu0 0.0
    %149 = vmatpush1.msra.mxu0 0.0
    %150 = vmatprep.subr.mxu0 0.0
    %151 = vmatpush1.msra.mxu0 0.0
    %152 = vmatprep.subr.mxu0 0.0
    %153 = vmatpush1.msra.mxu0 0.0
    %154 = vmatprep.subr.mxu0 0.0
    %155 = vmatpush1.msra.mxu0 0.0
    %156 = vmatprep.subr.mxu0 0.0
    %157 = vmatpush1.msra.mxu0 0.0
    %158 = vmatprep.subr.mxu0 0.0
    %159 = vmatpush1.msra.mxu0 0.0
    %160 = vmatprep.subr.mxu0 0.0
    %161 = vmatpush1.msra.mxu0 0.0
    %162 = vmatprep.subr.mxu0 0.0
    %163 = vmatpush1.msra.mxu0 0.0
    %164 = vmatprep.subr.mxu0 0.0
    %165 = vmatpush1.msra.mxu0 0.0
    %166 = vmatprep.subr.mxu0 0.0
    %167 = vmatpush1.msra.mxu0 0.0
    %168 = vmatprep.subr.mxu0 0.0
    %169 = vmatpush1.msra.mxu0 0.0
    %170 = vmatprep.subr.mxu0 0.0
    %171 = vmatpush1.msra.mxu0 0.0
    %172 = vmatprep.subr.mxu0 0.0
    %173 = vmatpush1.msra.mxu0 0.0
    %174 = vmatprep.subr.mxu0 0.0
    %175 = vmatpush1.msra.mxu0 0.0
    %176 = vmatprep.subr.mxu0 0.0
    %177 = vmatpush1.msra.mxu0 0.0
    %178 = vmatprep.subr.mxu0 0.0
    %179 = vmatpush1.msra.mxu0 0.0
    %180 = vmatprep.subr.mxu0 0.0
    %181 = vmatpush1.msra.mxu0 0.0
    %182 = vmatprep.subr.mxu0 0.0
    %183 = vmatpush1.msra.mxu0 0.0
    %184 = vmatprep.subr.mxu0 0.0
    %185 = vmatpush1.msra.mxu0 0.0
    %186 = vmatprep.subr.mxu0 0.0
    %187 = vmatpush1.msra.mxu0 0.0
    %188 = vmatprep.subr.mxu0 0.0
    %189 = vmatpush1.msra.mxu0 0.0
    %190 = vmatprep.subr.mxu0 0.0
    %191 = vmatpush1.msra.mxu0 0.0
    %192 = vmatprep.mubr.f32.mxu0 0.0
    %193 = vmatmul.mubr.f32.gmra.mrb[0].mxu0 %v126
    %v194 = vpop.f32.mrb[0].mxu0
    %v195 = vadd.f32 %v122, %v194
    %v196 = vpop.f32.mrb[0].mxu0
    %197 = vdwg.mxu0
    %v198 = vmax.f32 %v195, 0.0
    %v199 = vld [vmem:[#allocation8] sm:$0xff]
    %v200 = vld [vmem:[#allocation8 + $0x8] sm:$0xff]
    %v201 = vld [vmem:[#allocation8 + $0x10] sm:$0xff]
    %v202 = vld [vmem:[#allocation8 + $0x18] sm:$0xff]
    %v203 = vld [vmem:[#allocation8 + $0x20] sm:$0xff]
    %v204 = vld [vmem:[#allocation8 + $0x28] sm:$0xff]
    %v205 = vld [vmem:[#allocation8 + $0x30] sm:$0xff]
    %v206 = vld [vmem:[#allocation8 + $0x38] sm:$0xff]
    %v207 = vld [vmem:[#allocation8 + $0x40] sm:$0xff]
    %v208 = vld [vmem:[#allocation8 + $0x48] sm:$0xff]
    %v209 = vld [vmem:[#allocation8 + $0x50] sm:$0xff]
    %v210 = vld [vmem:[#allocation8 + $0x58] sm:$0xff]
    %v211 = vld [vmem:[#allocation8 + $0x60] sm:$0xff]
    %v212 = vld [vmem:[#allocation8 + $0x68] sm:$0xff]
    %v213 = vld [vmem:[#allocation8 + $0x70] sm:$0xff]
    %v214 = vld [vmem:[#allocation8 + $0x78] sm:$0xff]
    %v215 = vld [vmem:[%s5] sm:$0x1]
    %v217 = vlaneseq
    %v218 = vshrl.u32 %v217, 7
    %v219 = vsub.s32 0, %v218
    %v220 = vrot.slane %v215, %v219
    %222 = vmatprep.subr.mxu0 0.0
    %223 = vmatpush1.msra.mxu0 %v199
    %224 = vmatprep.subr.mxu0 0.0
    %225 = vmatpush1.msra.mxu0 %v200
    %226 = vmatprep.subr.mxu0 0.0
    %227 = vmatpush1.msra.mxu0 %v201
    %228 = vmatprep.subr.mxu0 0.0
    %229 = vmatpush1.msra.mxu0 %v202
    %230 = vmatprep.subr.mxu0 0.0
    %231 = vmatpush1.msra.mxu0 %v203
    %232 = vmatprep.subr.mxu0 0.0
    %233 = vmatpush1.msra.mxu0 %v204
    %234 = vmatprep.subr.mxu0 0.0
    %235 = vmatpush1.msra.mxu0 %v205
    %236 = vmatprep.subr.mxu0 0.0
    %237 = vmatpush1.msra.mxu0 %v206
    %238 = vmatprep.subr.mxu0 0.0
    %239 = vmatpush1.msra.mxu0 %v207
    %240 = vmatprep.subr.mxu0 0.0
    %241 = vmatpush1.msra.mxu0 %v208
    %242 = vmatprep.subr.mxu0 0.0
    %243 = vmatpush1.msra.mxu0 %v209
    %244 = vmatprep.subr.mxu0 0.0
    %245 = vmatpush1.msra.mxu0 %v210
    %246 = vmatprep.subr.mxu0 0.0
    %247 = vmatpush1.msra.mxu0 %v211
    %248 = vmatprep.subr.mxu0 0.0
    %249 = vmatpush1.msra.mxu0 %v212
    %250 = vmatprep.subr.mxu0 0.0
    %251 = vmatpush1.msra.mxu0 %v213
    %252 = vmatprep.subr.mxu0 0.0
    %253 = vmatpush1.msra.mxu0 %v214
    %254 = vmatprep.subr.mxu0 0.0
    %255 = vmatpush1.msra.mxu0 0.0
    %256 = vmatprep.subr.mxu0 0.0
    %257 = vmatpush1.msra.mxu0 0.0
    %258 = vmatprep.subr.mxu0 0.0
    %259 = vmatpush1.msra.mxu0 0.0
    %260 = vmatprep.subr.mxu0 0.0
    %261 = vmatpush1.msra.mxu0 0.0
    %262 = vmatprep.subr.mxu0 0.0
    %263 = vmatpush1.msra.mxu0 0.0
    %264 = vmatprep.subr.mxu0 0.0
    %265 = vmatpush1.msra.mxu0 0.0
    %266 = vmatprep.subr.mxu0 0.0
    %267 = vmatpush1.msra.mxu0 0.0
    %268 = vmatprep.subr.mxu0 0.0
    %269 = vmatpush1.msra.mxu0 0.0
    %270 = vmatprep.subr.mxu0 0.0
    %271 = vmatpush1.msra.mxu0 0.0
    %272 = vmatprep.subr.mxu0 0.0
    %273 = vmatpush1.msra.mxu0 0.0
    %274 = vmatprep.subr.mxu0 0.0
    %275 = vmatpush1.msra.mxu0 0.0
    %276 = vmatprep.subr.mxu0 0.0
    %277 = vmatpush1.msra.mxu0 0.0
    %278 = vmatprep.subr.mxu0 0.0
    %279 = vmatpush1.msra.mxu0 0.0
    %280 = vmatprep.subr.mxu0 0.0
    %281 = vmatpush1.msra.mxu0 0.0
    %282 = vmatprep.subr.mxu0 0.0
    %283 = vmatpush1.msra.mxu0 0.0
    %284 = vmatprep.subr.mxu0 0.0
    %285 = vmatpush1.msra.mxu0 0.0
    %286 = vmatprep.mubr.f32.mxu0 0.0
    %287 = vmatmul.mubr.f32.gmra.mrb[0].mxu0 %v198
    %v288 = vpop.f32.mrb[0].mxu0
    %v289 = vadd.f32 %v220, %v288
    %v290 = vpop.f32.mrb[0].mxu0
    %291 = vdwg.mxu0
    %v292 = vmax.f32 %v289, 0.0
    %v293 = vld [vmem:[#allocation10] sm:$0xff]
    %v294 = vld [vmem:[#allocation10 + $0x8] sm:$0xff]
    %v295 = vld [vmem:[#allocation10 + $0x10] sm:$0xff]
    %v296 = vld [vmem:[#allocation10 + $0x18] sm:$0xff]
    %v297 = vld [vmem:[#allocation10 + $0x20] sm:$0xff]
    %v298 = vld [vmem:[#allocation10 + $0x28] sm:$0xff]
    %v299 = vld [vmem:[#allocation10 + $0x30] sm:$0xff]
    %v300 = vld [vmem:[#allocation10 + $0x38] sm:$0xff]
    %v301 = vld [vmem:[#allocation10 + $0x40] sm:$0xff]
    %v302 = vld [vmem:[#allocation10 + $0x48] sm:$0xff]
    %v303 = vld [vmem:[#allocation10 + $0x50] sm:$0xff]
    %v304 = vld [vmem:[#allocation10 + $0x58] sm:$0xff]
    %v305 = vld [vmem:[#allocation10 + $0x60] sm:$0xff]
    %v306 = vld [vmem:[#allocation10 + $0x68] sm:$0xff]
    %v307 = vld [vmem:[#allocation10 + $0x70] sm:$0xff]
    %v308 = vld [vmem:[#allocation10 + $0x78] sm:$0xff]
    %v309 = vld [vmem:[%s7] sm:$0x1]
    %v311 = vlaneseq
    %v312 = vshrl.u32 %v311, 7
    %v313 = vsub.s32 0, %v312
    %v314 = vrot.slane %v309, %v313
    %316 = vmatprep.subr.mxu0 0.0
    %317 = vmatpush1.msra.mxu0 %v293
    %318 = vmatprep.subr.mxu0 0.0
    %319 = vmatpush1.msra.mxu0 %v294
    %320 = vmatprep.subr.mxu0 0.0
    %321 = vmatpush1.msra.mxu0 %v295
    %322 = vmatprep.subr.mxu0 0.0
    %323 = vmatpush1.msra.mxu0 %v296
    %324 = vmatprep.subr.mxu0 0.0
    %325 = vmatpush1.msra.mxu0 %v297
    %326 = vmatprep.subr.mxu0 0.0
    %327 = vmatpush1.msra.mxu0 %v298
    %328 = vmatprep.subr.mxu0 0.0
    %329 = vmatpush1.msra.mxu0 %v299
    %330 = vmatprep.subr.mxu0 0.0
    %331 = vmatpush1.msra.mxu0 %v300
    %332 = vmatprep.subr.mxu0 0.0
    %333 = vmatpush1.msra.mxu0 %v301
    %334 = vmatprep.subr.mxu0 0.0
    %335 = vmatpush1.msra.mxu0 %v302
    %336 = vmatprep.subr.mxu0 0.0
    %337 = vmatpush1.msra.mxu0 %v303
    %338 = vmatprep.subr.mxu0 0.0
    %339 = vmatpush1.msra.mxu0 %v304
    %340 = vmatprep.subr.mxu0 0.0
    %341 = vmatpush1.msra.mxu0 %v305
    %342 = vmatprep.subr.mxu0 0.0
    %343 = vmatpush1.msra.mxu0 %v306
    %344 = vmatprep.subr.mxu0 0.0
    %345 = vmatpush1.msra.mxu0 %v307
    %346 = vmatprep.subr.mxu0 0.0
    %347 = vmatpush1.msra.mxu0 %v308
    %348 = vmatprep.subr.mxu0 0.0
    %349 = vmatpush1.msra.mxu0 0.0
    %350 = vmatprep.subr.mxu0 0.0
    %351 = vmatpush1.msra.mxu0 0.0
    %352 = vmatprep.subr.mxu0 0.0
    %353 = vmatpush1.msra.mxu0 0.0
    %354 = vmatprep.subr.mxu0 0.0
    %355 = vmatpush1.msra.mxu0 0.0
    %356 = vmatprep.subr.mxu0 0.0
    %357 = vmatpush1.msra.mxu0 0.0
    %358 = vmatprep.subr.mxu0 0.0
    %359 = vmatpush1.msra.mxu0 0.0
    %360 = vmatprep.subr.mxu0 0.0
    %361 = vmatpush1.msra.mxu0 0.0
    %362 = vmatprep.subr.mxu0 0.0
    %363 = vmatpush1.msra.mxu0 0.0
    %364 = vmatprep.subr.mxu0 0.0
    %365 = vmatpush1.msra.mxu0 0.0
    %366 = vmatprep.subr.mxu0 0.0
    %367 = vmatpush1.msra.mxu0 0.0
    %368 = vmatprep.subr.mxu0 0.0
    %369 = vmatpush1.msra.mxu0 0.0
    %370 = vmatprep.subr.mxu0 0.0
    %371 = vmatpush1.msra.mxu0 0.0
    %372 = vmatprep.subr.mxu0 0.0
    %373 = vmatpush1.msra.mxu0 0.0
    %374 = vmatprep.subr.mxu0 0.0
    %375 = vmatpush1.msra.mxu0 0.0
    %376 = vmatprep.subr.mxu0 0.0
    %377 = vmatpush1.msra.mxu0 0.0
    %378 = vmatprep.subr.mxu0 0.0
    %379 = vmatpush1.msra.mxu0 0.0
    %380 = vmatprep.mubr.f32.mxu0 0.0
    %381 = vmatmul.mubr.f32.gmra.mrb[0].mxu0 %v292
    %v382 = vpop.f32.mrb[0].mxu0
    %v383 = vadd.f32 %v314, %v382
    %v384 = vpop.f32.mrb[0].mxu0
    %385 = vdwg.mxu0
    %v386 = vmax.f32 %v383, 0.0
    %v387 = vld [vmem:[#allocation11] sm:$0xff]
    %v388 = vld [vmem:[#allocation11 + $0x8] sm:$0xff]
    %v389 = vld [vmem:[#allocation11 + $0x10] sm:$0xff]
    %v390 = vld [vmem:[#allocation11 + $0x18] sm:$0xff]
    %v391 = vld [vmem:[#allocation11 + $0x20] sm:$0xff]
    %v392 = vld [vmem:[#allocation11 + $0x28] sm:$0xff]
    %v393 = vld [vmem:[#allocation11 + $0x30] sm:$0xff]
    %v394 = vld [vmem:[#allocation11 + $0x38] sm:$0xff]
    %v395 = vld [vmem:[#allocation11 + $0x40] sm:$0xff]
    %v396 = vld [vmem:[#allocation11 + $0x48] sm:$0xff]
    %v397 = vld [vmem:[#allocation11 + $0x50] sm:$0xff]
    %v398 = vld [vmem:[#allocation11 + $0x58] sm:$0xff]
    %v399 = vld [vmem:[#allocation11 + $0x60] sm:$0xff]
    %v400 = vld [vmem:[#allocation11 + $0x68] sm:$0xff]
    %v401 = vld [vmem:[#allocation11 + $0x70] sm:$0xff]
    %v402 = vld [vmem:[#allocation11 + $0x78] sm:$0xff]
    %v403 = vld [vmem:[#allocation11 + $0x80] sm:$0xff]
    %v404 = vld [vmem:[#allocation11 + $0x88] sm:$0xff]
    %v405 = vld [vmem:[#allocation11 + $0x90] sm:$0xff]
    %v406 = vld [vmem:[#allocation11 + $0x98] sm:$0xff]
    %v407 = vld [vmem:[#allocation11 + $0xa0] sm:$0xff]
    %v408 = vld [vmem:[#allocation11 + $0xa8] sm:$0xff]
    %v409 = vld [vmem:[#allocation11 + $0xb0] sm:$0xff]
    %v410 = vld [vmem:[#allocation11 + $0xb8] sm:$0xff]
    %v411 = vld [vmem:[#allocation11 + $0xc0] sm:$0xff]
    %v412 = vld [vmem:[#allocation11 + $0xc8] sm:$0xff]
    %v413 = vld [vmem:[#allocation11 + $0xd0] sm:$0xff]
    %v414 = vld [vmem:[#allocation11 + $0xd8] sm:$0xff]
    %v415 = vld [vmem:[#allocation11 + $0xe0] sm:$0xff]
    %v416 = vld [vmem:[#allocation11 + $0xe8] sm:$0xff]
    %v417 = vld [vmem:[#allocation11 + $0xf0] sm:$0xff]
    %v418 = vld [vmem:[#allocation11 + $0xf8] sm:$0xff]
    %v419 = vld [vmem:[%s9] sm:$0x3]
    %v421 = vlaneseq
    %v422 = vshrl.u32 %v421, 7
    %v423 = vsub.s32 0, %v422
    %v424 = vrot.slane %v419, %v423
    %v425 = vlaneseq
    %v426 = vshrl.u32 %v425, 7
    %v427 = vsub.s32 1, %v426
    %v428 = vrot.slane %v419, %v427
    %431 = vmatprep.subr.mxu0 %v388
    %432 = vmatpush1.msra.mxu0 %v387
    %433 = vmatprep.subr.mxu0 %v390
    %434 = vmatpush1.msra.mxu0 %v389
    %435 = vmatprep.subr.mxu0 %v392
    %436 = vmatpush1.msra.mxu0 %v391
    %437 = vmatprep.subr.mxu0 %v394
    %438 = vmatpush1.msra.mxu0 %v393
    %439 = vmatprep.subr.mxu0 %v396
    %440 = vmatpush1.msra.mxu0 %v395
    %441 = vmatprep.subr.mxu0 %v398
    %442 = vmatpush1.msra.mxu0 %v397
    %443 = vmatprep.subr.mxu0 %v400
    %444 = vmatpush1.msra.mxu0 %v399
    %445 = vmatprep.subr.mxu0 %v402
    %446 = vmatpush1.msra.mxu0 %v401
    %447 = vmatprep.subr.mxu0 %v404
    %448 = vmatpush1.msra.mxu0 %v403
    %449 = vmatprep.subr.mxu0 %v406
    %450 = vmatpush1.msra.mxu0 %v405
    %451 = vmatprep.subr.mxu0 %v408
    %452 = vmatpush1.msra.mxu0 %v407
    %453 = vmatprep.subr.mxu0 %v410
    %454 = vmatpush1.msra.mxu0 %v409
    %455 = vmatprep.subr.mxu0 %v412
    %456 = vmatpush1.msra.mxu0 %v411
    %457 = vmatprep.subr.mxu0 %v414
    %458 = vmatpush1.msra.mxu0 %v413
    %459 = vmatprep.subr.mxu0 %v416
    %460 = vmatpush1.msra.mxu0 %v415
    %461 = vmatprep.subr.mxu0 %v418
    %462 = vmatpush1.msra.mxu0 %v417
    %463 = vmatprep.subr.mxu0 0.0
    %464 = vmatpush1.msra.mxu0 0.0
    %465 = vmatprep.subr.mxu0 0.0
    %466 = vmatpush1.msra.mxu0 0.0
    %467 = vmatprep.subr.mxu0 0.0
    %468 = vmatpush1.msra.mxu0 0.0
    %469 = vmatprep.subr.mxu0 0.0
    %470 = vmatpush1.msra.mxu0 0.0
    %471 = vmatprep.subr.mxu0 0.0
    %472 = vmatpush1.msra.mxu0 0.0
    %473 = vmatprep.subr.mxu0 0.0
    %474 = vmatpush1.msra.mxu0 0.0
    %475 = vmatprep.subr.mxu0 0.0
    %476 = vmatpush1.msra.mxu0 0.0
    %477 = vmatprep.subr.mxu0 0.0
    %478 = vmatpush1.msra.mxu0 0.0
    %479 = vmatprep.subr.mxu0 0.0
    %480 = vmatpush1.msra.mxu0 0.0
    %481 = vmatprep.subr.mxu0 0.0
    %482 = vmatpush1.msra.mxu0 0.0
    %483 = vmatprep.subr.mxu0 0.0
    %484 = vmatpush1.msra.mxu0 0.0
    %485 = vmatprep.subr.mxu0 0.0
    %486 = vmatpush1.msra.mxu0 0.0
    %487 = vmatprep.subr.mxu0 0.0
    %488 = vmatpush1.msra.mxu0 0.0
    %489 = vmatprep.subr.mxu0 0.0
    %490 = vmatpush1.msra.mxu0 0.0
    %491 = vmatprep.subr.mxu0 0.0
    %492 = vmatpush1.msra.mxu0 0.0
    %493 = vmatprep.subr.mxu0 0.0
    %494 = vmatpush1.msra.mxu0 0.0
    %495 = vmatprep.mubr.f32.mxu0 0.0
    %496 = vmatmul.mubr.f32.gmra.mrb[0].mxu0 %v386
    %v497 = vpop.f32.mrb[0].mxu0
    %v498 = vadd.f32 %v424, %v497
    %v499 = vpop.f32.mrb[0].mxu0
    %v500 = vadd.f32 %v428, %v499
    %501 = vdwg.mxu0
    %v502 = vmax.f32 %v500, -20.0
    %v503 = vmin.f32 %v502, 2.0
    %v504 = vmul.f32 %v503, 1.442695
    %v505 = vpow.pop %v504
    %v506 = vld [vmem:[#allocation5] sm:$0xff]
    %v507 = vmul.f32 %v505, %v506
    %v508 = vadd.f32 %v498, %v507
    %v509 = vtanh.pop %v508
    %v510 = vmul.f32 %v506, %v506
    %v511 = vmul.f32 %v510, -0.5
    %v512 = vsub.f32 %v511, %v503
    %v513 = vsub.f32 %v512, 0.9189385
    %v514 = vsub.f32 0.6931472, %v508
    %v515 = vmul.f32 %v508, -2.0
    %v516 = vmax.f32 %v515, 0.0
    %vm517 = vcmp.ne.f32.partialorder %v515, %v515
    %v518 = vadd.f32 %v515, 0.0
    %v519 = vand.u32 2147483647, %v515
    %v520 = vsub.f32 0.0, %v519
    %v521 = vmul.f32 %v520, 1.442695
    %v522 = vpow.pop %v521
    %v523 = vadd.f32 %v522, 1.0
    %v524 = vlog2.pop %v523
    %v525 = vmul.f32 %v524, 0.6931472
    %v526 = vmul.f32 -0.5, %v522
    %v527 = vadd.f32 %v526, 1.0
    %v528 = vmul.f32 %v527, %v522
    %v529 = vand.u32 2147483647, %v522
    %vm530 = vcmp.lt.f32.partialorder %v529, 0.0004427343
    %v531 = vsel %vm530, %v528, %v525
    %v532 = vadd.f32 %v516, %v531
    %v533 = vsel %vm517, %v518, %v532
    %v534 = vsub.f32 %v514, %v533
    %v535 = vmul.f32 %v534, 2.0
    %v536 = vsub.f32 %v513, %v535
    %v537 = vlaneseq
    %v538 = vand.u32 %v537, 127
    %vm539 = vcmp.lt.s32.totalorder %v538, 8
    %v540 = vsel %vm539, %v536, 0.0
    %541 = vadd.xlane.f32.xlu0 %v540
    %v542 = vpop.xlane.xlu0 %541
    %vm543 = vcmp.eq.s32.totalorder %v538, 8
    %v544 = vsel %vm543, %v542, 0.0
    %v545 = vadd.f32 %v509, %v544
    %546 = vst [vmem:[#allocation13] sm:$0xff] %v545
    // Predicated region
    $region66: #{tpu_custom_call.1} parent=1 // pred_check
      _
    $region67: #{tpu_custom_call.1} parent=1 // pred_check_branch
      %548 = sbr.rel (0) target = $region69
    $region68: #{tpu_custom_call.1} parent=1 // pred_region
      %s550 = ssub.s32 128, 128
      %551 = vsyncadd [#allocation4], %s550
      %s553 = sshll.u32 [#allocation13], 4
      %s554 = int_to_ptr.vmem [resolvable:$true] %s553
      %556 = dma.vmem_to_hbm [thread:$0]  %s554, 128, %s10, [#allocation4]
    $region69: #{tpu_custom_call.1} parent=1 // pred_fallthru
      _
    // Predicated region
    $region70: #{tpu_custom_call.1} parent=1 // pred_check
      _
    $region71: #{tpu_custom_call.1} parent=1 // pred_check_branch
      %558 = sbr.rel (0) target = $region73
    $region72: #{tpu_custom_call.1} parent=1 // pred_region
      %559 = dma.done [#allocation4], 128
    $region73: #{tpu_custom_call.1} parent=1 // pred_fallthru
      _
    %560 = vsyncpa [#allocation3], 1
    %561 = vsyncpa [#allocation6], 1
    %562 = vsyncpa [#allocation9], 1
    %563 = vsyncpa [#allocation12], 1
    %564 = vsyncpa [#allocation4], 1

</llo_original>
